<compile_context>
chip_gen: v7x
topology: tpu7x:2x2x1
jax: 0.10.0
libtpu: 0.0.40
codegen_flags: <defaults>
</compile_context>

<pallas_src>
import math

import jax
import jax.numpy as jnp
from jax.experimental import pallas as pl
from jax.experimental.pallas import tpu as pltpu


def _gelu_tanh(x):
    # GELU(approximate='tanh'): 0.5*x*(1 + tanh(sqrt(2/pi)*(x + 0.044715*x^3)))
    c = math.sqrt(2.0 / math.pi)
    return 0.5 * x * (1.0 + jnp.tanh(c * (x + 0.044715 * x * x * x)))


def _caption_embedder_kernel(cap_ref,    # (TM, C)  bf16   caption rows (batch-fused M)
                             drop_ref,   # (TM, 1)  int32  per-row drop flag
                             yemb_ref,   # (TM, C)  bf16   tiled y_embedding (grid-invariant)
                             w1_ref,     # (C, H)   bf16
                             b1_ref,     # (1, H)   f32
                             w2_ref,     # (H, H)   bf16
                             b2_ref,     # (1, H)   f32
                             out_ref):   # (TM, H)  output dtype
    # token_drop: rows whose batch was dropped take the y_embedding row instead.
    x = jnp.where(drop_ref[...] != 0, yemb_ref[...], cap_ref[...])

    # Mlp.fc1: bf16 MXU matmul, f32 accumulate; bias + GELU(tanh) in f32.
    h = jnp.dot(x, w1_ref[...], preferred_element_type=jnp.float32) + b1_ref[...]
    h = _gelu_tanh(h)

    # Mlp.fc2: bf16 MXU matmul, f32 accumulate.
    o = jnp.dot(h.astype(w2_ref.dtype), w2_ref[...],
                preferred_element_type=jnp.float32) + b2_ref[...]
    out_ref[...] = o.astype(out_ref.dtype)


def _pick_batches_per_tile(B, T, max_rows):
    """Largest k dividing B such that k*T <= max(T, max_rows)."""
    best = 1
    cap = max(T, max_rows)
    for k in range(1, B + 1):
        if B % k == 0 and k * T <= cap:
            best = k
    return best


def _invariant_spec(block_shape, index_map):
    """BlockSpec for a grid-invariant operand; single-buffer it when supported."""
    try:
        return pl.BlockSpec(block_shape, index_map, pipeline_mode=pl.Buffered(1))
    except (TypeError, AttributeError):
        # older jax without pipeline_mode / Buffered: fall back to default buffering
        return pl.BlockSpec(block_shape, index_map)


def caption_embedder_pallas(caption, drop_ids, y_embedding, w1, b1, w2, b2,
                            max_rows_per_tile=256):
    """caption: (B, 1, T, C); drop_ids: (B,) int32; returns (B, 1, T, H)."""
    B, one, T, C = caption.shape
    H = w1.shape[1]
    M = B * T

    # --- M tiling: k whole batches per tile (tiles never cross a batch boundary) ---
    k = _pick_batches_per_tile(B, T, max_rows_per_tile)
    TM = k * T
    if TM % 8 != 0 and TM != M:
        # fall back to a single full-M tile if the tile violates (8,128) sublane tiling
        k, TM = B, M
    num_tiles = M // TM

    # --- dtype handling: bf16 operands, f32 biases / accumulation ---
    cdt = jnp.bfloat16
    cap2d = caption.reshape(M, C).astype(cdt)
    drop_rows = jnp.repeat(drop_ids.astype(jnp.int32), T).reshape(M, 1)
    yemb_tile = jnp.tile(y_embedding.astype(cdt), (k, 1))          # (TM, C)
    w1c = w1.astype(cdt)
    w2c = w2.astype(cdt)
    b1c = b1.astype(jnp.float32).reshape(1, H)
    b2c = b2.astype(jnp.float32).reshape(1, H)

    out_dtype = caption.dtype
    out_isz = jnp.dtype(out_dtype).itemsize

    # --- explicit VMEM budget from actual block sizes (streamed = 2 bufs, const = 1) ---
    streamed_bytes = 2 * (TM * C * 2 + TM * 1 * 4 + TM * H * out_isz)
    const_bytes = TM * C * 2 + C * H * 2 + H * H * 2 + 2 * H * 4
    vmem_limit = int(min(max(1.5 * (streamed_bytes + const_bytes),
                             32 * 1024 * 1024),
                         56 * 1024 * 1024))

    cost = pl.CostEstimate(
        flops=2 * M * C * H + 2 * M * H * H,
        transcendentals=M * H,
        bytes_accessed=(M * C * 2 + M * 4 + TM * C * 2
                        + C * H * 2 + H * H * 2 + 2 * H * 4
                        + M * H * out_isz))

    out = pl.pallas_call(
        _caption_embedder_kernel,
        out_shape=jax.ShapeDtypeStruct((M, H), out_dtype),
        grid=(num_tiles,),
        in_specs=[
            pl.BlockSpec((TM, C), lambda i: (i, 0)),        # caption rows (streamed)
            pl.BlockSpec((TM, 1), lambda i: (i, 0)),        # per-row drop mask (streamed)
            _invariant_spec((TM, C), lambda i: (0, 0)),     # y_embedding tile
            _invariant_spec((C, H),  lambda i: (0, 0)),     # w1
            _invariant_spec((1, H),  lambda i: (0, 0)),     # b1
            _invariant_spec((H, H),  lambda i: (0, 0)),     # w2
            _invariant_spec((1, H),  lambda i: (0, 0)),     # b2
        ],
        out_specs=pl.BlockSpec((TM, H), lambda i: (i, 0)),  # lane-dense H output
        compiler_params=pltpu.CompilerParams(
            dimension_semantics=("parallel",),
            vmem_limit_bytes=vmem_limit),
        cost_estimate=cost,
    )(cap2d, drop_rows, yemb_tile, w1c, b1c, w2c, b2c)

    return out.reshape(B, one, T, H)


class CaptionEmbedderJAX:
    """JAX/Pallas port of CaptionEmbedder (forward only)."""

    def __init__(self, in_channels, hidden_size, uncond_prob, token_num=120,
                 key=jax.random.PRNGKey(0), max_rows_per_tile=256):
        k_yemb, k_w1, k_b1, k_w2, k_b2 = jax.random.split(key, 5)
        self.uncond_prob = uncond_prob
        self.token_num = token_num
        self.in_channels = in_channels
        self.hidden_size = hidden_size
        self.max_rows_per_tile = max_rows_per_tile
        # buffer: randn(token_num, in_channels) / sqrt(in_channels)
        self.y_embedding = (jax.random.normal(k_yemb, (token_num, in_channels),
                                              jnp.float32)
                            / math.sqrt(in_channels))
        # Mlp(fc1: C->H, fc2: H->H); deterministic synthetic init.
        self.w1 = jax.random.normal(k_w1, (in_channels, hidden_size), jnp.float32) * 0.02
        self.b1 = jax.random.normal(k_b1, (hidden_size,), jnp.float32) * 0.02
        self.w2 = jax.random.normal(k_w2, (hidden_size, hidden_size), jnp.float32) * 0.02
        self.b2 = jax.random.normal(k_b2, (hidden_size,), jnp.float32) * 0.02

    def __call__(self, caption, train, force_drop_ids=None,
                 drop_key=jax.random.PRNGKey(1)):
        if train:
            if caption.shape[2:] != self.y_embedding.shape:
                raise ValueError(
                    "caption embedding shape must same as y embedding shape")
        use_dropout = self.uncond_prob > 0
        B = caption.shape[0]
        if (train and use_dropout) or (force_drop_ids is not None):
            if force_drop_ids is None:
                drop_ids = (jax.random.uniform(drop_key, (B,))
                            < self.uncond_prob).astype(jnp.int32)
            else:
                drop_ids = (force_drop_ids == 1).astype(jnp.int32)
        else:
            drop_ids = jnp.zeros((B,), jnp.int32)
        return caption_embedder_pallas(caption, drop_ids, self.y_embedding,
                                       self.w1, self.b1, self.w2, self.b2,
                                       max_rows_per_tile=self.max_rows_per_tile)


def _reference_forward(module, caption, drop_ids):
    """Pure-JAX reference mirroring the kernel numerics (bf16 MXU, f32 accumulate)."""
    x = jnp.where(drop_ids[:, None, None, None] == 1,
                  module.y_embedding[None, None], caption)
    xb = x.astype(jnp.bfloat16)
    w1b = module.w1.astype(jnp.bfloat16)
    w2b = module.w2.astype(jnp.bfloat16)
    h = jnp.einsum('bntc,ch->bnth', xb, w1b,
                   preferred_element_type=jnp.float32) + module.b1
    h = _gelu_tanh(h)
    o = jnp.einsum('bnth,hk->bntk', h.astype(jnp.bfloat16), w2b,
                   preferred_element_type=jnp.float32) + module.b2
    return o.astype(caption.dtype)


if __name__ == "__main__":
    # Small deterministic example: B=4 batches, T=8 tokens, C=32 in, H=32 hidden.
    # max_rows_per_tile=16 forces 2 batches per M tile and a 2-step grid so the
    # batch-fused tiling + grid-invariant single buffering is actually exercised.
    B, T, C, H = 4, 8, 32, 32
    key = jax.random.PRNGKey(0)
    k_cap, k_params = jax.random.split(key)

    module = CaptionEmbedderJAX(in_channels=C, hidden_size=H,
                                uncond_prob=0.5, token_num=T, key=k_params,
                                max_rows_per_tile=16)
    caption = jax.random.normal(k_cap, (B, 1, T, C), jnp.float32)

    # explicit force_drop_ids so the run is fully deterministic (mix of drop / keep)
    force_drop_ids = jnp.array([1, 0, 0, 1], jnp.int32)

    out = module(caption, train=True, force_drop_ids=force_drop_ids)
    out = jax.block_until_ready(out)

    assert out.shape == (B, 1, T, H), out.shape

    ref = _reference_forward(module, caption,
                             (force_drop_ids == 1).astype(jnp.int32))
    err = float(jnp.max(jnp.abs(out - ref)))
    assert err < 1e-2, err

    print("KERNEL_OK")
</pallas_src>

<mosaic_0001>
module attributes {stable_mosaic.version = 11 : i64} {
  func.func @_caption_embedder_kernel(%arg0: i32, %arg1: memref<16x32xbf16, #tpu.memory_space<vmem>>, %arg2: memref<16x1xi32, #tpu.memory_space<vmem>>, %arg3: memref<16x32xbf16, #tpu.memory_space<vmem>>, %arg4: memref<32x32xbf16, #tpu.memory_space<vmem>>, %arg5: memref<1x32xf32, #tpu.memory_space<vmem>>, %arg6: memref<32x32xbf16, #tpu.memory_space<vmem>>, %arg7: memref<1x32xf32, #tpu.memory_space<vmem>>, %arg8: memref<16x32xf32, #tpu.memory_space<vmem>>) attributes {dimension_semantics = [#tpu.dimension_semantics<parallel>], iteration_bounds = array<i64: 2>, scalar_prefetch = 0 : i64, scratch_operands = 0 : i64, tpu.core_type = #tpu.core_type<tc>, window_params = [{transform_indices = @transform_0, window_bounds = array<i64: 16, 32>}, {transform_indices = @transform_1, window_bounds = array<i64: 16, 1>}, {pipeline_mode = #tpu.pipeline_mode<synchronous>, transform_indices = @transform_2, window_bounds = array<i64: 16, 32>}, {pipeline_mode = #tpu.pipeline_mode<synchronous>, transform_indices = @transform_3, window_bounds = array<i64: 32, 32>}, {pipeline_mode = #tpu.pipeline_mode<synchronous>, transform_indices = @transform_4, window_bounds = array<i64: 1, 32>}, {pipeline_mode = #tpu.pipeline_mode<synchronous>, transform_indices = @transform_5, window_bounds = array<i64: 32, 32>}, {pipeline_mode = #tpu.pipeline_mode<synchronous>, transform_indices = @transform_6, window_bounds = array<i64: 1, 32>}, {transform_indices = @transform_7, window_bounds = array<i64: 16, 32>}]} {
    %c0 = arith.constant 0 : index
    %c0_0 = arith.constant 0 : index
    %0 = vector.load %arg2[%c0, %c0_0] : memref<16x1xi32, #tpu.memory_space<vmem>>, vector<16x1xi32>
    %c0_i32 = arith.constant 0 : i32
    %1 = vector.broadcast %c0_i32 : i32 to vector<16x1xi32>
    %2 = arith.cmpi ne, %0, %1 : vector<16x1xi32>
    %c0_1 = arith.constant 0 : index
    %c0_2 = arith.constant 0 : index
    %3 = vector.load %arg3[%c0_1, %c0_2] : memref<16x32xbf16, #tpu.memory_space<vmem>>, vector<16x32xbf16>
    %c0_3 = arith.constant 0 : index
    %c0_4 = arith.constant 0 : index
    %4 = vector.load %arg1[%c0_3, %c0_4] : memref<16x32xbf16, #tpu.memory_space<vmem>>, vector<16x32xbf16>
    %5 = vector.shape_cast %2 : vector<16x1xi1> to vector<16x1xi1>
    %6 = vector.broadcast %5 : vector<16x1xi1> to vector<16x32xi1>
    %7 = arith.select %6, %3, %4 : vector<16x32xi1>, vector<16x32xbf16>
    %c0_5 = arith.constant 0 : index
    %c0_6 = arith.constant 0 : index
    %8 = vector.load %arg4[%c0_5, %c0_6] : memref<32x32xbf16, #tpu.memory_space<vmem>>, vector<32x32xbf16>
    %cst = arith.constant dense<0.000000e+00> : vector<16x32xf32>
    %9 = tpu.matmul %7, %8, %cst {dimension_numbers = #tpu.dot_dimension_numbers<[1], [0], [0], [1], [0, 0, 1, 1], [], []>} : vector<16x32xbf16>, vector<32x32xbf16>, vector<16x32xf32> -> vector<16x32xf32>
    %c0_7 = arith.constant 0 : index
    %c0_8 = arith.constant 0 : index
    %10 = vector.load %arg5[%c0_7, %c0_8] : memref<1x32xf32, #tpu.memory_space<vmem>>, vector<1x32xf32>
    %11 = vector.broadcast %10 : vector<1x32xf32> to vector<16x32xf32>
    %12 = arith.addf %9, %11 : vector<16x32xf32>
    %cst_9 = arith.constant 5.000000e-01 : f32
    %13 = vector.broadcast %cst_9 : f32 to vector<16x32xf32>
    %14 = arith.mulf %13, %12 : vector<16x32xf32>
    %cst_10 = arith.constant 4.471500e-02 : f32
    %15 = vector.broadcast %cst_10 : f32 to vector<16x32xf32>
    %16 = arith.mulf %15, %12 : vector<16x32xf32>
    %17 = arith.mulf %16, %12 : vector<16x32xf32>
    %18 = arith.mulf %17, %12 : vector<16x32xf32>
    %19 = arith.addf %12, %18 : vector<16x32xf32>
    %cst_11 = arith.constant 0.797884583 : f32
    %20 = vector.broadcast %cst_11 : f32 to vector<16x32xf32>
    %21 = arith.mulf %20, %19 : vector<16x32xf32>
    %22 = math.tanh %21 : vector<16x32xf32>
    %cst_12 = arith.constant 1.000000e+00 : f32
    %23 = vector.broadcast %cst_12 : f32 to vector<16x32xf32>
    %24 = arith.addf %23, %22 : vector<16x32xf32>
    %25 = arith.mulf %14, %24 : vector<16x32xf32>
    %26 = arith.truncf %25 : vector<16x32xf32> to vector<16x32xbf16>
    %c0_13 = arith.constant 0 : index
    %c0_14 = arith.constant 0 : index
    %27 = vector.load %arg6[%c0_13, %c0_14] : memref<32x32xbf16, #tpu.memory_space<vmem>>, vector<32x32xbf16>
    %cst_15 = arith.constant dense<0.000000e+00> : vector<16x32xf32>
    %28 = tpu.matmul %26, %27, %cst_15 {dimension_numbers = #tpu.dot_dimension_numbers<[1], [0], [0], [1], [0, 0, 1, 1], [], []>} : vector<16x32xbf16>, vector<32x32xbf16>, vector<16x32xf32> -> vector<16x32xf32>
    %c0_16 = arith.constant 0 : index
    %c0_17 = arith.constant 0 : index
    %29 = vector.load %arg7[%c0_16, %c0_17] : memref<1x32xf32, #tpu.memory_space<vmem>>, vector<1x32xf32>
    %30 = vector.broadcast %29 : vector<1x32xf32> to vector<16x32xf32>
    %31 = arith.addf %28, %30 : vector<16x32xf32>
    %c0_18 = arith.constant 0 : index
    %c0_19 = arith.constant 0 : index
    %32 = vector.load %arg8[%c0_18, %c0_19] : memref<16x32xf32, #tpu.memory_space<vmem>>, vector<16x32xf32>
    tpu.vector_store %arg8[%c0_18, %c0_19], %31 {strides = array<i32>} : memref<16x32xf32, #tpu.memory_space<vmem>>, vector<16x32xf32>,
    return
  }
  func.func @transform_0(%arg0: i32) -> (i32, i32) {
    %c0_i32 = arith.constant 0 : i32
    %c0_i32_0 = arith.constant 0 : i32
    return %arg0, %c0_i32 : i32, i32
  }
  func.func @transform_1(%arg0: i32) -> (i32, i32) {
    %c0_i32 = arith.constant 0 : i32
    %c0_i32_0 = arith.constant 0 : i32
    return %arg0, %c0_i32 : i32, i32
  }
  func.func @transform_2(%arg0: i32) -> (i32, i32) {
    %c0_i32 = arith.constant 0 : i32
    %c0_i32_0 = arith.constant 0 : i32
    %c0_i32_1 = arith.constant 0 : i32
    return %c0_i32, %c0_i32_0 : i32, i32
  }
  func.func @transform_3(%arg0: i32) -> (i32, i32) {
    %c0_i32 = arith.constant 0 : i32
    %c0_i32_0 = arith.constant 0 : i32
    %c0_i32_1 = arith.constant 0 : i32
    return %c0_i32, %c0_i32_0 : i32, i32
  }
  func.func @transform_4(%arg0: i32) -> (i32, i32) {
    %c0_i32 = arith.constant 0 : i32
    %c0_i32_0 = arith.constant 0 : i32
    %c0_i32_1 = arith.constant 0 : i32
    return %c0_i32, %c0_i32_0 : i32, i32
  }
  func.func @transform_5(%arg0: i32) -> (i32, i32) {
    %c0_i32 = arith.constant 0 : i32
    %c0_i32_0 = arith.constant 0 : i32
    %c0_i32_1 = arith.constant 0 : i32
    return %c0_i32, %c0_i32_0 : i32, i32
  }
  func.func @transform_6(%arg0: i32) -> (i32, i32) {
    %c0_i32 = arith.constant 0 : i32
    %c0_i32_0 = arith.constant 0 : i32
    %c0_i32_1 = arith.constant 0 : i32
    return %c0_i32, %c0_i32_0 : i32, i32
  }
  func.func @transform_7(%arg0: i32) -> (i32, i32) {
    %c0_i32 = arith.constant 0 : i32
    %c0_i32_0 = arith.constant 0 : i32
    return %arg0, %c0_i32 : i32, i32
  }
}

</mosaic_0001>

<llo_original>
// kernel: tpu_custom_call.1
$region0: #{tpu_custom_call.1}
  #allocation0 [shape = 'u32[]', space=smem, size = 0x4, offset = 0x4, fixed_abs, tag = 'smem constant byte address 0x4 - core index']
  #allocation1 [shape = 'u32[144,128]{1,0:T(1,128)}', space=vmem, size = 0x12000, scoped, tag = 'internal scratch']
  %s0 = inlined_call_operand.vmem [shape: bf16[32,32], index: 0, kind: input, shape index: {}]
  %s1 = inlined_call_operand.vmem [shape: s32[32,1], index: 1, kind: input, shape index: {}]
  %s2 = inlined_call_operand.hbm [shape: bf16[16,32], index: 2, kind: input, shape index: {}]
  %s3 = inlined_call_operand.vmem [shape: bf16[32,32], index: 3, kind: input, shape index: {}]
  %s4 = inlined_call_operand.hbm [shape: f32[1,32], index: 4, kind: input, shape index: {}]
  %s5 = inlined_call_operand.vmem [shape: bf16[32,32], index: 5, kind: input, shape index: {}]
  %s6 = inlined_call_operand.vmem [shape: f32[1,32], index: 6, kind: input, shape index: {}]
  %s7 = inlined_call_operand.hbm [shape: f32[32,32], index: 7, kind: output, shape index: {}]
  %s8 = sld [smem:[#allocation0]]
  $region69: #{tpu_custom_call.1} parent=0
    _
  %s10 = ssub.s32 1, %s8
  %s11 = scalar_select 0, %s10, %s8
  $region1: #{tpu_custom_call.1} parent=0
    #allocation2 [shape = 'u8[4096]{0}', space=vmem, size = 0x1000, scoped, tag = 'input window, operand 2, single buffered']
    #allocation3 [shape = 's32[2]{0}', space=sflag, size = 0x8, scoped, tag = 'scoped memory for tpu_custom_call.1']
    #allocation4 [shape = 's32[2]{0}', space=sflag, size = 0x8, scoped, tag = 'scoped memory for tpu_custom_call.1']
    #allocation5 [shape = 'u8[512]{0}', space=vmem, size = 0x400, scoped, tag = 'input window, operand 4, single buffered']
    #allocation6 [shape = 's32[1]{0}', space=sflag, size = 0x4, scoped, tag = 'scoped memory for tpu_custom_call.1']
    #allocation7 [shape = 'u8[16384]{0}', space=vmem, size = 0x4000, scoped, tag = 'output window, operand 0']
    %12 = vsyncpa [#allocation3], 0
    %13 = vsyncpa [#allocation6], 0
    %14 = vsyncpa [#allocation4], 0
    %s15 = scalar_lea.sflag [#allocation4], 1
    %16 = vsyncpa %s15, 0
    loop: start=0, step=1, limit=4
    $region2: #{tpu_custom_call.1} parent=1 // loop_pre_header
      _
    $region3: #{tpu_custom_call.1} parent=1 // loop_header
      %s18 = sphi 0, %s22
      %p19 = scmp.ge.s32.totalorder %s18, 4
      %s28 = sphi 0, %s30
      %s31 = sphi 0, %s28
      %s32 = sphi 0, %s31
      %s48 = sphi 0, %s32
      %s54 = sphi 0, %s56
      %s57 = sphi 0, %s54
      %s58 = sphi 0, %s57
      %s74 = sphi 0, %s58
      %s78 = sphi 0, %s78
      %s80 = sphi 0, %s78
      %s81 = sphi 0, %s80
      %s95 = sphi 0, %s81
      %s99 = sphi 0, %s99
      %s101 = sphi 0, %s99
      %s102 = sphi 0, %s101
      %s116 = sphi 0, %s102
      %s120 = sphi 0, %s120
      %s122 = sphi 0, %s120
      %s123 = sphi 0, %s122
      %s137 = sphi 0, %s123
      %s141 = sphi 0, %s141
      %s143 = sphi 0, %s141
      %s144 = sphi 0, %s143
      %s158 = sphi 0, %s144
      %s162 = sphi 0, %s162
      %s164 = sphi 0, %s162
      %s165 = sphi 0, %s164
      %s179 = sphi 0, %s165
      %s185 = sphi 0, %s187
      %s188 = sphi 0, %s185
      %s189 = sphi 0, %s188
      %s205 = sphi 0, %s189
    $region4: #{tpu_custom_call.1} parent=1 // loop_header_branch
      %21 = sbr.rel (%p19) target = $region8
    $region5: #{tpu_custom_call.1} parent=1 // loop_body
      %s23 = ssub.s32 %s18, 1
      %s24 = ssub.s32 %s18, 2
      %s25 = sadd.s32 %s18, 1
      %s26 = ssub.s32 %s18, %s25
      %p27 = scmp.eq.s32.totalorder %s26, 0
      %s29 = sadd.s32 %s28, 1
      %s30 = scalar_select %p27, %s28, %s29
      %p33 = pneg %p27
      %p34 = scmp.eq.s32.totalorder %s18, 1
      %p35 = por %p33, %p34
      %p36 = scmp.ne.s32.totalorder %s28, %s31
      %p37 = scmp.eq.s32.totalorder %s18, 0
      %p38 = por %p36, %p37
      %p39 = scmp.ne.s32.totalorder %s28, %s31
      %p40 = scmp.eq.s32.totalorder %s23, 1
      %p41 = por %p39, %p40
      %p42 = scmp.ne.s32.totalorder %s31, %s32
      %p43 = scmp.eq.s32.totalorder %s23, 0
      %p44 = por %p42, %p43
      %p45 = scmp.ne.s32.totalorder %s31, %s32
      %p46 = scmp.eq.s32.totalorder %s24, 1
      %p47 = por %p45, %p46
      %p49 = scmp.ne.s32.totalorder %s32, %s48
      %p50 = scmp.eq.s32.totalorder %s24, 0
      %p51 = por %p49, %p50
      %s52 = ssub.s32 %s18, %s25
      %p53 = scmp.eq.s32.totalorder %s52, 0
      %s55 = sadd.s32 %s54, 1
      %s56 = scalar_select %p53, %s54, %s55
      %p59 = pneg %p53
      %p60 = scmp.eq.s32.totalorder %s18, 1
      %p61 = por %p59, %p60
      %p62 = scmp.ne.s32.totalorder %s54, %s57
      %p63 = scmp.eq.s32.totalorder %s18, 0
      %p64 = por %p62, %p63
      %p65 = scmp.ne.s32.totalorder %s54, %s57
      %p66 = scmp.eq.s32.totalorder %s23, 1
      %p67 = por %p65, %p66
      %p68 = scmp.ne.s32.totalorder %s57, %s58
      %p69 = scmp.eq.s32.totalorder %s23, 0
      %p70 = por %p68, %p69
      %p71 = scmp.ne.s32.totalorder %s57, %s58
      %p72 = scmp.eq.s32.totalorder %s24, 1
      %p73 = por %p71, %p72
      %p75 = scmp.ne.s32.totalorder %s58, %s74
      %p76 = scmp.eq.s32.totalorder %s24, 0
      %p77 = por %p75, %p76
      %s79 = sadd.s32 %s78, 1
      %p82 = scmp.eq.s32.totalorder %s18, 1
      %p83 = scmp.ne.s32.totalorder %s78, %s80
      %p84 = scmp.eq.s32.totalorder %s18, 0
      %p85 = por %p83, %p84
      %p86 = scmp.ne.s32.totalorder %s78, %s80
      %p87 = scmp.eq.s32.totalorder %s23, 1
      %p88 = por %p86, %p87
      %p89 = scmp.ne.s32.totalorder %s80, %s81
      %p90 = scmp.eq.s32.totalorder %s23, 0
      %p91 = por %p89, %p90
      %p92 = scmp.ne.s32.totalorder %s80, %s81
      %p93 = scmp.eq.s32.totalorder %s24, 1
      %p94 = por %p92, %p93
      %p96 = scmp.ne.s32.totalorder %s81, %s95
      %p97 = scmp.eq.s32.totalorder %s24, 0
      %p98 = por %p96, %p97
      %s100 = sadd.s32 %s99, 1
      %p103 = scmp.eq.s32.totalorder %s18, 1
      %p104 = scmp.ne.s32.totalorder %s99, %s101
      %p105 = scmp.eq.s32.totalorder %s18, 0
      %p106 = por %p104, %p105
      %p107 = scmp.ne.s32.totalorder %s99, %s101
      %p108 = scmp.eq.s32.totalorder %s23, 1
      %p109 = por %p107, %p108
      %p110 = scmp.ne.s32.totalorder %s101, %s102
      %p111 = scmp.eq.s32.totalorder %s23, 0
      %p112 = por %p110, %p111
      %p113 = scmp.ne.s32.totalorder %s101, %s102
      %p114 = scmp.eq.s32.totalorder %s24, 1
      %p115 = por %p113, %p114
      %p117 = scmp.ne.s32.totalorder %s102, %s116
      %p118 = scmp.eq.s32.totalorder %s24, 0
      %p119 = por %p117, %p118
      %s121 = sadd.s32 %s120, 1
      %p124 = scmp.eq.s32.totalorder %s18, 1
      %p125 = scmp.ne.s32.totalorder %s120, %s122
      %p126 = scmp.eq.s32.totalorder %s18, 0
      %p127 = por %p125, %p126
      %p128 = scmp.ne.s32.totalorder %s120, %s122
      %p129 = scmp.eq.s32.totalorder %s23, 1
      %p130 = por %p128, %p129
      %p131 = scmp.ne.s32.totalorder %s122, %s123
      %p132 = scmp.eq.s32.totalorder %s23, 0
      %p133 = por %p131, %p132
      %p134 = scmp.ne.s32.totalorder %s122, %s123
      %p135 = scmp.eq.s32.totalorder %s24, 1
      %p136 = por %p134, %p135
      %p138 = scmp.ne.s32.totalorder %s123, %s137
      %p139 = scmp.eq.s32.totalorder %s24, 0
      %p140 = por %p138, %p139
      %s142 = sadd.s32 %s141, 1
      %p145 = scmp.eq.s32.totalorder %s18, 1
      %p146 = scmp.ne.s32.totalorder %s141, %s143
      %p147 = scmp.eq.s32.totalorder %s18, 0
      %p148 = por %p146, %p147
      %p149 = scmp.ne.s32.totalorder %s141, %s143
      %p150 = scmp.eq.s32.totalorder %s23, 1
      %p151 = por %p149, %p150
      %p152 = scmp.ne.s32.totalorder %s143, %s144
      %p153 = scmp.eq.s32.totalorder %s23, 0
      %p154 = por %p152, %p153
      %p155 = scmp.ne.s32.totalorder %s143, %s144
      %p156 = scmp.eq.s32.totalorder %s24, 1
      %p157 = por %p155, %p156
      %p159 = scmp.ne.s32.totalorder %s144, %s158
      %p160 = scmp.eq.s32.totalorder %s24, 0
      %p161 = por %p159, %p160
      %s163 = sadd.s32 %s162, 1
      %p166 = scmp.eq.s32.totalorder %s18, 1
      %p167 = scmp.ne.s32.totalorder %s162, %s164
      %p168 = scmp.eq.s32.totalorder %s18, 0
      %p169 = por %p167, %p168
      %p170 = scmp.ne.s32.totalorder %s162, %s164
      %p171 = scmp.eq.s32.totalorder %s23, 1
      %p172 = por %p170, %p171
      %p173 = scmp.ne.s32.totalorder %s164, %s165
      %p174 = scmp.eq.s32.totalorder %s23, 0
      %p175 = por %p173, %p174
      %p176 = scmp.ne.s32.totalorder %s164, %s165
      %p177 = scmp.eq.s32.totalorder %s24, 1
      %p178 = por %p176, %p177
      %p180 = scmp.ne.s32.totalorder %s165, %s179
      %p181 = scmp.eq.s32.totalorder %s24, 0
      %p182 = por %p180, %p181
      %s183 = ssub.s32 %s18, %s25
      %p184 = scmp.eq.s32.totalorder %s183, 0
      %s186 = sadd.s32 %s185, 1
      %s187 = scalar_select %p184, %s185, %s186
      %p190 = pneg %p184
      %p191 = scmp.eq.s32.totalorder %s18, 1
      %p192 = por %p190, %p191
      %p193 = scmp.ne.s32.totalorder %s185, %s188
      %p194 = scmp.eq.s32.totalorder %s18, 0
      %p195 = por %p193, %p194
      %p196 = scmp.ne.s32.totalorder %s185, %s188
      %p197 = scmp.eq.s32.totalorder %s23, 1
      %p198 = por %p196, %p197
      %p199 = scmp.ne.s32.totalorder %s188, %s189
      %p200 = scmp.eq.s32.totalorder %s23, 0
      %p201 = por %p199, %p200
      %p202 = scmp.ne.s32.totalorder %s188, %s189
      %p203 = scmp.eq.s32.totalorder %s24, 1
      %p204 = por %p202, %p203
      %p206 = scmp.ne.s32.totalorder %s189, %s205
      %p207 = scmp.eq.s32.totalorder %s24, 0
      %p208 = por %p206, %p207
      %p209 = scmp.le.s32.totalorder 1, %s18
      %p210 = scmp.lt.s32.totalorder %s18, 3
      %p211 = pnand %p209, %p210
      %p212 = pneg %p211
      // Predicated region
      $region9: #{tpu_custom_call.1} parent=5 // pred_check
        _
      $region10: #{tpu_custom_call.1} parent=5 // pred_check_branch
        %214 = sbr.rel (%p211) target = $region12
      $region11: #{tpu_custom_call.1} parent=5 // pred_region
        %s215 = ssub.s32 %s18, 1
        // Predicated region
        $region13: #{tpu_custom_call.1} parent=11 // pred_check
          %p216 = pneg %p91
        $region14: #{tpu_custom_call.1} parent=11 // pred_check_branch
          %218 = sbr.rel (%p216) target = $region16
        $region15: #{tpu_custom_call.1} parent=11 // pred_region
          %s220 = ssub.s32 128, 128
          %221 = vsyncadd [#allocation3], %s220
          %s222 = sshll.u32 [#allocation2], 4
          %s223 = int_to_ptr.vmem [resolvable:$true] %s222
          %228 = dma.hbm_to_vmem [thread:$0]  %s2, 128, %s223, [#allocation3], 64, 64, 4
        $region16: #{tpu_custom_call.1} parent=11 // pred_fallthru
          _
        // Predicated region
        $region17: #{tpu_custom_call.1} parent=11 // pred_check
          %p229 = pneg %p112
        $region18: #{tpu_custom_call.1} parent=11 // pred_check_branch
          %231 = sbr.rel (%p229) target = $region20
        $region19: #{tpu_custom_call.1} parent=11 // pred_region
          _
        $region20: #{tpu_custom_call.1} parent=11 // pred_fallthru
          _
        // Predicated region
        $region21: #{tpu_custom_call.1} parent=11 // pred_check
          %p232 = pneg %p133
        $region22: #{tpu_custom_call.1} parent=11 // pred_check_branch
          %234 = sbr.rel (%p232) target = $region24
        $region23: #{tpu_custom_call.1} parent=11 // pred_region
          %s236 = ssub.s32 16, 16
          %237 = vsyncadd [#allocation6], %s236
          %s239 = sshll.u32 [#allocation5], 4
          %s240 = int_to_ptr.vmem [resolvable:$true] %s239
          %242 = dma.hbm_to_vmem [thread:$0]  %s4, 16, %s240, [#allocation6]
        $region24: #{tpu_custom_call.1} parent=11 // pred_fallthru
          _
        // Predicated region
        $region25: #{tpu_custom_call.1} parent=11 // pred_check
          %p243 = pneg %p154
        $region26: #{tpu_custom_call.1} parent=11 // pred_check_branch
          %245 = sbr.rel (%p243) target = $region28
        $region27: #{tpu_custom_call.1} parent=11 // pred_region
          _
        $region28: #{tpu_custom_call.1} parent=11 // pred_fallthru
          _
        // Predicated region
        $region29: #{tpu_custom_call.1} parent=11 // pred_check
          %p246 = pneg %p175
        $region30: #{tpu_custom_call.1} parent=11 // pred_check_branch
          %248 = sbr.rel (%p246) target = $region32
        $region31: #{tpu_custom_call.1} parent=11 // pred_region
          _
        $region32: #{tpu_custom_call.1} parent=11 // pred_fallthru
          _
      $region12: #{tpu_custom_call.1} parent=5 // pred_fallthru
        _
      %p249 = scmp.lt.s32.totalorder %s18, 2
      // Predicated region
      $region33: #{tpu_custom_call.1} parent=5 // pred_check
        %p250 = pneg %p249
      $region34: #{tpu_custom_call.1} parent=5 // pred_check_branch
        %252 = sbr.rel (%p250) target = $region36
      $region35: #{tpu_custom_call.1} parent=5 // pred_region
        // Predicated region
        $region37: #{tpu_custom_call.1} parent=35 // pred_check
          %p253 = pneg %p38
        $region38: #{tpu_custom_call.1} parent=35 // pred_check_branch
          %255 = sbr.rel (%p253) target = $region40
        $region39: #{tpu_custom_call.1} parent=35 // pred_region
          %s256 = smul.u32 2, %s18
          %p257 = scmp.lt.s32.totalorder %s256, 3
          %s258 = scalar_select %p257, %s256, 3
          %s259 = smul.addr %s258, 4
          %s260 = scalar_lea.vmem %s0, %s259
          %s261 = smul.u32 2, %s18
        $region40: #{tpu_custom_call.1} parent=35 // pred_fallthru
          _
        // Predicated region
        $region41: #{tpu_custom_call.1} parent=35 // pred_check
          %p262 = pneg %p64
        $region42: #{tpu_custom_call.1} parent=35 // pred_check_branch
          %264 = sbr.rel (%p262) target = $region44
        $region43: #{tpu_custom_call.1} parent=35 // pred_region
          %s265 = smul.u32 2, %s18
          %p266 = scmp.lt.s32.totalorder %s265, 3
          %s267 = scalar_select %p266, %s265, 3
          %s268 = smul.addr %s267, 8
          %s269 = scalar_lea.vmem %s1, %s268
          %s270 = smul.u32 2, %s18
        $region44: #{tpu_custom_call.1} parent=35 // pred_fallthru
          _
      $region36: #{tpu_custom_call.1} parent=5 // pred_fallthru
        _
      %p271 = scmp.le.s32.totalorder 1, %s18
      %p272 = scmp.lt.s32.totalorder %s18, 3
      %p273 = pnand %p271, %p272
      %p274 = pneg %p273
      // Predicated region
      $region45: #{tpu_custom_call.1} parent=5 // pred_check
        _
      $region46: #{tpu_custom_call.1} parent=5 // pred_check_branch
        %276 = sbr.rel (%p273) target = $region48
      $region47: #{tpu_custom_call.1} parent=5 // pred_region
        %s277 = ssub.s32 %s18, 1
        // Predicated region
        $region49: #{tpu_custom_call.1} parent=47 // pred_check
          %p278 = pneg %p91
        $region50: #{tpu_custom_call.1} parent=47 // pred_check_branch
          %280 = sbr.rel (%p278) target = $region52
        $region51: #{tpu_custom_call.1} parent=47 // pred_region
          %281 = dma.done [#allocation3], 128
        $region52: #{tpu_custom_call.1} parent=47 // pred_fallthru
          _
        // Predicated region
        $region53: #{tpu_custom_call.1} parent=47 // pred_check
          %p282 = pneg %p133
        $region54: #{tpu_custom_call.1} parent=47 // pred_check_branch
          %284 = sbr.rel (%p282) target = $region56
        $region55: #{tpu_custom_call.1} parent=47 // pred_region
          %285 = dma.done [#allocation6], 16
        $region56: #{tpu_custom_call.1} parent=47 // pred_fallthru
          _
        %s286 = smul.u32 2, %s23
        %p287 = scmp.lt.s32.totalorder %s286, 3
        %s288 = scalar_select %p287, %s286, 3
        %s289 = smul.addr %s288, 4
        %s290 = scalar_lea.vmem %s0, %s289
        %p291 = pneg %p44
        %p292 = pneg %p41
        %s293 = smul.u32 2, %s23
        %p294 = scmp.lt.s32.totalorder %s293, 3
        %s295 = scalar_select %p294, %s293, 3
        %s296 = smul.addr %s295, 8
        %s297 = scalar_lea.vmem %s1, %s296
        %p298 = pneg %p70
        %p299 = pneg %p67
        %p300 = pneg %p91
        %p301 = pneg %p88
        %p302 = pneg %p112
        %p303 = pneg %p109
        %p304 = pneg %p133
        %p305 = pneg %p130
        %p306 = pneg %p154
        %p307 = pneg %p151
        %p308 = pneg %p175
        %p309 = pneg %p172
        %p310 = pneg %p201
        %p311 = pneg %p198
        %s312 = sand.u32 %s188, 1
        %s313 = scalar_lea.sflag [#allocation4], %s312
        %s314 = sand.u32 %s188, 1
        %s315 = smul.addr %s314, 16
        %s316 = scalar_lea.vmem [#allocation7], %s315
        %s317 = smul.u32 2, %s23
        %p318 = scmp.lt.s32.totalorder %s317, 3
        %s319 = scalar_select %p318, %s317, 3
        %s320 = smul.addr %s319, 4
        %s321 = scalar_lea.vmem %s0, %s320
        %s322 = smul.u32 2, %s23
        %s323 = smul.u32 2, %s23
        %p324 = scmp.lt.s32.totalorder %s323, 3
        %s325 = scalar_select %p324, %s323, 3
        %s326 = smul.addr %s325, 8
        %s327 = scalar_lea.vmem %s1, %s326
        %s328 = smul.u32 2, %s23
        %s329 = smul.u32 2, %s23
        %v331 = vld [vmem:[%s327] sm:$0xff]
        %v332 = vld [vmem:[%s327 + $0x8] sm:$0xff]
        %vm333 = vcmp.ne.s32.totalorder %v331, 0
        %vm334 = vcmp.ne.s32.totalorder %v332, 0
        %v335 = vld [vmem:[#allocation2] sm:$0xf]
        %v336 = vld [vmem:[#allocation2 + $0x4] sm:$0xf]
        %v337 = vld [vmem:[%s321] sm:$0xf]
        %v338 = vld [vmem:[%s321 + $0x4] sm:$0xf]
        %v339 = vsel %vm333, 1, 0
        %v340 = vsel %vm334, 1, 0
        %341 = vset.pattern.permute.xlu0 0
        %342 = vperm.xlu0 %341, %v339
        %v343 = vpop.permute.xlu0 %342
        %344 = vset.pattern.permute.xlu0 0
        %345 = vperm.xlu0 %344, %v340
        %v346 = vpop.permute.xlu0 %345
        %vm347 = vcmp.eq.s32.totalorder %v343, 1
        %vm348 = vcmp.eq.s32.totalorder %v346, 1
        %vm349 = vmpackc.low %vm347, %vm347
        %vm350 = vmpackc.low %vm348, %vm348
        %v351 = vsel %vm349, %v335, %v337
        %v352 = vsel %vm350, %v336, %v338
        %v353 = vld [vmem:[%s3] sm:$0xf]
        %v354 = vld [vmem:[%s3 + $0x4] sm:$0xf]
        %v355 = vld [vmem:[%s3 + $0x8] sm:$0xf]
        %v356 = vld [vmem:[%s3 + $0xc] sm:$0xf]
        %v357 = vld [vmem:[#allocation5] sm:$0x1]
        %v359 = vlaneseq
        %v360 = vshrl.u32 %v359, 7
        %v361 = vsub.s32 0, %v360
        %v362 = vrot.slane %v357, %v361
        %v366 = vunpack.c.l.b16 %v351
        %v367 = vunpack.c.l.b16 %v352
        %v368 = vpack.c.b16 %v367, %v366
        %v373 = vunpack.c.l.b16 %v353
        %v374 = vunpack.c.l.b16 %v354
        %v375 = vunpack.c.l.b16 %v355
        %v376 = vunpack.c.l.b16 %v356
        %v377 = vpack.c.b16 %v374, %v373
        %v378 = vpack.c.b16 %v376, %v375
        %vm381 = vcmask 261120
        %v383 = vsel %vm381, %v368, 0
        %385 = vmatprep.subr.bf16.mxu0 0
        %386 = vmatpush1.bf16.msra.mxu0 %v377
        %387 = vmatprep.subr.bf16.mxu0 0
        %388 = vmatpush1.bf16.msra.mxu0 %v378
        %389 = vmatprep.subr.bf16.mxu0 0
        %390 = vmatpush1.bf16.msra.mxu0 0
        %391 = vmatprep.subr.bf16.mxu0 0
        %392 = vmatpush1.bf16.msra.mxu0 0
        %393 = vmatprep.subr.bf16.mxu0 0
        %394 = vmatpush1.bf16.msra.mxu0 0
        %395 = vmatprep.subr.bf16.mxu0 0
        %396 = vmatpush1.bf16.msra.mxu0 0
        %397 = vmatprep.subr.bf16.mxu0 0
        %398 = vmatpush1.bf16.msra.mxu0 0
        %399 = vmatprep.subr.bf16.mxu0 0
        %400 = vmatpush1.bf16.msra.mxu0 0
        %401 = vmatprep.subr.bf16.mxu0 0
        %402 = vmatpush1.bf16.msra.mxu0 0
        %403 = vmatprep.subr.bf16.mxu0 0
        %404 = vmatpush1.bf16.msra.mxu0 0
        %405 = vmatprep.subr.bf16.mxu0 0
        %406 = vmatpush1.bf16.msra.mxu0 0
        %407 = vmatprep.subr.bf16.mxu0 0
        %408 = vmatpush1.bf16.msra.mxu0 0
        %409 = vmatprep.subr.bf16.mxu0 0
        %410 = vmatpush1.bf16.msra.mxu0 0
        %411 = vmatprep.subr.bf16.mxu0 0
        %412 = vmatpush1.bf16.msra.mxu0 0
        %413 = vmatprep.subr.bf16.mxu0 0
        %414 = vmatpush1.bf16.msra.mxu0 0
        %415 = vmatprep.subr.bf16.mxu0 0
        %416 = vmatpush1.bf16.msra.mxu0 0
        %417 = vmatprep.mubr.bf16.mxu0 0
        %418 = vmatmul.mubr.bf16.gmra.mrb[0].mxu0 %v383
        %v419 = vpop.f32.mrb[0].mxu0
        %v420 = vadd.f32 %v362, %v419
        %v421 = vpop.f32.mrb[0].mxu0
        %v422 = vpop.f32.mrb[0].mxu0
        %v423 = vadd.f32 %v362, %v422
        %v424 = vpop.f32.mrb[0].mxu0
        %425 = vdwg.mxu0
        %v426 = vmul.f32 %v420, 0.5
        %v427 = vmul.f32 %v423, 0.5
        %v428 = vmul.f32 %v420, 0.044715
        %v429 = vmul.f32 %v423, 0.044715
        %v430 = vmul.f32 %v428, %v420
        %v431 = vmul.f32 %v429, %v423
        %v432 = vmul.f32 %v430, %v420
        %v433 = vmul.f32 %v431, %v423
        %v434 = vadd.f32 %v420, %v432
        %v435 = vadd.f32 %v423, %v433
        %v436 = vmul.f32 %v434, 0.7978846
        %v437 = vmul.f32 %v435, 0.7978846
        %v438 = vtanh.pop %v436
        %v439 = vtanh.pop %v437
        %v440 = vadd.f32 %v438, 1.0
        %v441 = vadd.f32 %v439, 1.0
        %v442 = vmul.f32 %v426, %v440
        %v443 = vmul.f32 %v427, %v441
        %v444 = vpack.c.bf16 %v443, %v442
        %v445 = vld [vmem:[%s5] sm:$0xf]
        %v446 = vld [vmem:[%s5 + $0x4] sm:$0xf]
        %v447 = vld [vmem:[%s5 + $0x8] sm:$0xf]
        %v448 = vld [vmem:[%s5 + $0xc] sm:$0xf]
        %v449 = vld [vmem:[%s6] sm:$0x1]
        %v451 = vlaneseq
        %v452 = vshrl.u32 %v451, 7
        %v453 = vsub.s32 0, %v452
        %v454 = vrot.slane %v449, %v453
        %v460 = vunpack.c.l.b16 %v445
        %v461 = vunpack.c.l.b16 %v446
        %v462 = vunpack.c.l.b16 %v447
        %v463 = vunpack.c.l.b16 %v448
        %v464 = vpack.c.b16 %v461, %v460
        %v465 = vpack.c.b16 %v463, %v462
        %v469 = vsel %vm381, %v444, 0
        %471 = vmatprep.subr.bf16.mxu0 0
        %472 = vmatpush1.bf16.msra.mxu0 %v464
        %473 = vmatprep.subr.bf16.mxu0 0
        %474 = vmatpush1.bf16.msra.mxu0 %v465
        %475 = vmatprep.subr.bf16.mxu0 0
        %476 = vmatpush1.bf16.msra.mxu0 0
        %477 = vmatprep.subr.bf16.mxu0 0
        %478 = vmatpush1.bf16.msra.mxu0 0
        %479 = vmatprep.subr.bf16.mxu0 0
        %480 = vmatpush1.bf16.msra.mxu0 0
        %481 = vmatprep.subr.bf16.mxu0 0
        %482 = vmatpush1.bf16.msra.mxu0 0
        %483 = vmatprep.subr.bf16.mxu0 0
        %484 = vmatpush1.bf16.msra.mxu0 0
        %485 = vmatprep.subr.bf16.mxu0 0
        %486 = vmatpush1.bf16.msra.mxu0 0
        %487 = vmatprep.subr.bf16.mxu0 0
        %488 = vmatpush1.bf16.msra.mxu0 0
        %489 = vmatprep.subr.bf16.mxu0 0
        %490 = vmatpush1.bf16.msra.mxu0 0
        %491 = vmatprep.subr.bf16.mxu0 0
        %492 = vmatpush1.bf16.msra.mxu0 0
        %493 = vmatprep.subr.bf16.mxu0 0
        %494 = vmatpush1.bf16.msra.mxu0 0
        %495 = vmatprep.subr.bf16.mxu0 0
        %496 = vmatpush1.bf16.msra.mxu0 0
        %497 = vmatprep.subr.bf16.mxu0 0
        %498 = vmatpush1.bf16.msra.mxu0 0
        %499 = vmatprep.subr.bf16.mxu0 0
        %500 = vmatpush1.bf16.msra.mxu0 0
        %501 = vmatprep.subr.bf16.mxu0 0
        %502 = vmatpush1.bf16.msra.mxu0 0
        %503 = vmatprep.mubr.bf16.mxu0 0
        %504 = vmatmul.mubr.bf16.gmra.mrb[0].mxu0 %v469
        %v505 = vpop.f32.mrb[0].mxu0
        %v506 = vadd.f32 %v454, %v505
        %v507 = vpop.f32.mrb[0].mxu0
        %v508 = vpop.f32.mrb[0].mxu0
        %v509 = vadd.f32 %v454, %v508
        %v510 = vpop.f32.mrb[0].mxu0
        %511 = vdwg.mxu0
        %512 = vst.msk [vmem:[%s316] sm:$0xff] %vm381, %v506
        %513 = vst.msk [vmem:[%s316 + $0x8] sm:$0xff] %vm381, %v509
        %s514 = sand.u32 %s188, 1
        %s515 = scalar_lea.sflag [#allocation4], %s514
        %s516 = sand.u32 %s188, 1
        %s517 = smul.addr %s516, 16
        %s518 = scalar_lea.vmem [#allocation7], %s517
        // Predicated region
        $region57: #{tpu_custom_call.1} parent=47 // pred_check
          %p519 = pneg %p198
        $region58: #{tpu_custom_call.1} parent=47 // pred_check_branch
          %521 = sbr.rel (%p519) target = $region60
        $region59: #{tpu_custom_call.1} parent=47 // pred_region
          %s522 = smul.u32 2, %s23
          %s524 = ssub.s32 256, 256
          %525 = vsyncadd %s515, %s524
          %s526 = smul.addr %s522, 128
          %s527 = scalar_lea.hbm %s7, %s526
          %s528 = sshll.u32 %s518, 4
          %s529 = int_to_ptr.vmem [resolvable:$true] %s528
          %534 = dma.vmem_to_hbm [thread:$0]  %s529, 256, %s527, %s515, 128, 128, 8
        $region60: #{tpu_custom_call.1} parent=47 // pred_fallthru
          _
      $region48: #{tpu_custom_call.1} parent=5 // pred_fallthru
        _
      %p535 = scmp.le.s32.totalorder 2, %s18
      // Predicated region
      $region61: #{tpu_custom_call.1} parent=5 // pred_check
        %p536 = pneg %p535
      $region62: #{tpu_custom_call.1} parent=5 // pred_check_branch
        %538 = sbr.rel (%p536) target = $region64
      $region63: #{tpu_custom_call.1} parent=5 // pred_region
        %s539 = ssub.s32 %s18, 2
        // Predicated region
        $region65: #{tpu_custom_call.1} parent=63 // pred_check
          %p540 = pneg %p204
        $region66: #{tpu_custom_call.1} parent=63 // pred_check_branch
          %542 = sbr.rel (%p540) target = $region68
        $region67: #{tpu_custom_call.1} parent=63 // pred_region
          %s543 = sand.u32 %s189, 1
          %s544 = scalar_lea.sflag [#allocation4], %s543
          %s545 = sand.u32 %s189, 1
          %s546 = smul.addr %s545, 16
          %s547 = scalar_lea.vmem [#allocation7], %s546
          %548 = dma.done %s544, 256
        $region68: #{tpu_custom_call.1} parent=63 // pred_fallthru
          _
      $region64: #{tpu_custom_call.1} parent=5 // pred_fallthru
        _
    $region6: #{tpu_custom_call.1} parent=1 // loop_footer
      %s22 = sadd.s32 1, %s18
    $region7: #{tpu_custom_call.1} parent=1 // loop_footer_branch
      %17 = sbr.rel target = $region3
    $region8: #{tpu_custom_call.1} parent=1 // loop_exit
      _
    %549 = vsyncpa [#allocation3], 1
    %s550 = scalar_lea.sflag [#allocation3], 1
    %551 = vsyncpa %s550, 1
    %552 = vsyncpa [#allocation6], 1
    %553 = vsyncpa [#allocation4], 1
    %s554 = scalar_lea.sflag [#allocation4], 1
    %555 = vsyncpa %s554, 1

</llo_original>
